<compile_context>
chip_gen: v6e
topology: v6e:2x2x1
jax: 0.10.0
libtpu: 0.0.40
codegen_flags: <defaults>
</compile_context>

<pallas_src>
import functools

import jax
import jax.numpy as jnp
from jax import lax
from jax.experimental import pallas as pl
from jax.experimental.pallas import tpu as pltpu


# lhs (M, K) contracted with rhs (N, K) on K  ->  (M, N)   (i.e. lhs @ rhs.T)
NT_DIM_NUMBERS = (((1,), (1,)), ((), ()))


def _round_up(x, m):
    return (x + m - 1) // m * m


def make_ncf_kernel(num_layers, compute_dtype):
    """Fused NCF forward kernel for a fixed number of MLP layers."""

    def kernel(*refs):
        # inputs: eu_gmf, er_gmf, eu_mlp, er_mlp,
        #         W0_user, W0_item, b0, (W_i, b_i) for i=1..L-1,
        #         Wp_gmf, Wp_mlp, bp                     -> out (1, TB)
        (eu_gmf_ref, er_gmf_ref, eu_mlp_ref, er_mlp_ref,
         w0u_ref, w0r_ref, b0_ref) = refs[:7]
        wpg_ref, wpm_ref, bp_ref = refs[-4:-1]
        out_ref = refs[-1]
        mid_refs = refs[7:-4]   # (W_i, b_i) for i = 1 .. num_layers-1

        # --- GMF branch: elementwise product (VPU) ---
        gmf = eu_gmf_ref[...] * er_gmf_ref[...]                    # (TB, F)

        # --- MLP branch ---
        # First layer consumes concat(eu_mlp, er_mlp); concat-free via the
        # pre-split W0 halves.
        h = (jnp.dot(eu_mlp_ref[...], w0u_ref[...],
                     preferred_element_type=jnp.float32)
             + jnp.dot(er_mlp_ref[...], w0r_ref[...],
                       preferred_element_type=jnp.float32)
             + b0_ref[...])
        h = jnp.maximum(h, 0.0)                                    # ReLU

        # Remaining layers: Dropout(identity) -> Linear -> ReLU.
        for li in range(num_layers - 1):
            w_ref = mid_refs[2 * li]
            b_ref = mid_refs[2 * li + 1]
            h = (jnp.dot(h.astype(compute_dtype), w_ref[...],
                         preferred_element_type=jnp.float32)
                 + b_ref[...])
            h = jnp.maximum(h, 0.0)

        # --- prediction head: lane-dense (1, TB) row ---
        # pred_row = Wp_gmf @ gmf^T + Wp_mlp @ h^T + bp
        pred = (lax.dot_general(wpg_ref[...], gmf, NT_DIM_NUMBERS,
                                preferred_element_type=jnp.float32)
                + lax.dot_general(wpm_ref[...], h.astype(compute_dtype),
                                  NT_DIM_NUMBERS,
                                  preferred_element_type=jnp.float32)
                + bp_ref[...])
        out_ref[...] = pred

    return kernel


def ncf_forward(user, re, params, *, num_layers, factor_num,
                tile_b=1024, compute_dtype=jnp.bfloat16):
    """NCF forward. user/re: int32 (B,). Returns float32 (B,)."""
    assert tile_b % 128 == 0, "tile_b must be a multiple of 128 (lane width)"
    cd = compute_dtype
    B = user.shape[0]

    # batch tiling (pad B to a multiple of the tile size)
    TB = min(tile_b, _round_up(B, 8))
    B_pad = _round_up(B, TB)
    num_tiles = B_pad // TB
    if B_pad != B:
        user = jnp.pad(user, (0, B_pad - B))
        re = jnp.pad(re, (0, B_pad - B))

    # ---- glue: embedding gathers in plain JAX ----
    # TODO(synk): fuse these gathers into the kernel via scalar prefetch to
    # avoid the extra HBM round-trip of the gathered rows.
    eu_gmf = jnp.take(params["embed_user_GMF"], user, axis=0).astype(cd)
    er_gmf = jnp.take(params["embed_re_GMF"], re, axis=0).astype(cd)
    eu_mlp = jnp.take(params["embed_user_MLP"], user, axis=0).astype(cd)
    er_mlp = jnp.take(params["embed_re_MLP"], re, axis=0).astype(cd)

    F = factor_num
    D = eu_mlp.shape[1]                  # factor_num * 2**(num_layers-1)

    w0 = params["mlp_w0"]                # (2D, D), stored (in, out)
    wp = params["predict_w"]             # (2F, 1)

    operands = [
        eu_gmf, er_gmf, eu_mlp, er_mlp,
        w0[:D].astype(cd), w0[D:].astype(cd), params["mlp_b0"],
    ]
    for li in range(1, num_layers):
        operands.append(params[f"mlp_w{li}"].astype(cd))   # (in, out)
        operands.append(params[f"mlp_b{li}"])              # (1, out), f32
    operands += [
        wp[:F].reshape(1, F).astype(cd),                   # head weights (GMF)
        wp[F:].reshape(1, F).astype(cd),                   # head weights (MLP)
        params["predict_b"],                               # (1, 1), f32
    ]

    # activations: tiled along the batch; weights: constant block (resident)
    act_specs = [
        pl.BlockSpec((TB, F), lambda i: (i, 0)),
        pl.BlockSpec((TB, F), lambda i: (i, 0)),
        pl.BlockSpec((TB, D), lambda i: (i, 0)),
        pl.BlockSpec((TB, D), lambda i: (i, 0)),
    ]
    weight_specs = [pl.BlockSpec(op.shape, lambda i: (0, 0))
                    for op in operands[4:]]
    in_specs = act_specs + weight_specs

    out_spec = pl.BlockSpec((1, TB), lambda i: (0, i))     # lane-dense row
    out_shape = jax.ShapeDtypeStruct((1, B_pad), jnp.float32)

    # advisory cost estimate for the surrounding XLA schedule
    flops_per_row = F                                      # GMF elementwise
    in_size = 2 * D
    for _ in range(num_layers):
        out_size = in_size // 2
        flops_per_row += 2 * in_size * out_size
        in_size = out_size
    flops_per_row += 2 * (2 * F)                           # prediction head
    bytes_accessed = sum(int(op.size) * op.dtype.itemsize for op in operands)
    bytes_accessed += B_pad * 4                            # output
    cost = pl.CostEstimate(flops=int(B_pad) * int(flops_per_row),
                           transcendentals=0,
                           bytes_accessed=int(bytes_accessed))

    kernel = make_ncf_kernel(num_layers, cd)

    pred = pl.pallas_call(
        kernel,
        out_shape=out_shape,
        grid_spec=pltpu.PrefetchScalarGridSpec(
            num_scalar_prefetch=0,
            grid=(num_tiles,),
            in_specs=in_specs,
            out_specs=out_spec,
        ),
        compiler_params=pltpu.CompilerParams(
            dimension_semantics=("parallel",),
        ),
        cost_estimate=cost,
    )(*operands)

    return pred.reshape(-1)[:B]          # matches prediction.view(-1)


def init_params(key, number_user, number_restaurant, factor_num, num_layers):
    """Deterministic synthetic init mirroring NCF._init_weight_ shapes."""
    params = {}
    mlp_embed = factor_num * 2 ** (num_layers - 1)
    keys = jax.random.split(key, 6 + 2 * num_layers)
    ki = iter(range(len(keys)))

    # embeddings: normal(std=0.01)
    params["embed_user_GMF"] = 0.01 * jax.random.normal(
        keys[next(ki)], (number_user, factor_num), jnp.float32)
    params["embed_re_GMF"] = 0.01 * jax.random.normal(
        keys[next(ki)], (number_restaurant, factor_num), jnp.float32)
    params["embed_user_MLP"] = 0.01 * jax.random.normal(
        keys[next(ki)], (number_user, mlp_embed), jnp.float32)
    params["embed_re_MLP"] = 0.01 * jax.random.normal(
        keys[next(ki)], (number_restaurant, mlp_embed), jnp.float32)

    # MLP linears: xavier_uniform, zero bias. Stored as (in, out).
    for li in range(num_layers):
        in_size = factor_num * 2 ** (num_layers - li)
        out_size = in_size // 2
        limit = jnp.sqrt(6.0 / (in_size + out_size))
        params[f"mlp_w{li}"] = jax.random.uniform(
            keys[next(ki)], (in_size, out_size), jnp.float32, -limit, limit)
        params[f"mlp_b{li}"] = jnp.zeros((1, out_size), jnp.float32)

    # predict layer: kaiming_uniform(a=1), zero bias. Stored as (in, 1).
    in_size = factor_num * 2
    limit = jnp.sqrt(6.0 / (1.0 + 1.0 ** 2) / in_size)
    params["predict_w"] = jax.random.uniform(
        keys[next(ki)], (in_size, 1), jnp.float32, -limit, limit)
    params["predict_b"] = jnp.zeros((1, 1), jnp.float32)
    return params


def ncf_reference(user, re, params, *, num_layers):
    """Pure-JAX f32 reference for correctness checking."""
    eu_gmf = jnp.take(params["embed_user_GMF"], user, axis=0)
    er_gmf = jnp.take(params["embed_re_GMF"], re, axis=0)
    gmf = eu_gmf * er_gmf
    eu_mlp = jnp.take(params["embed_user_MLP"], user, axis=0)
    er_mlp = jnp.take(params["embed_re_MLP"], re, axis=0)
    h = jnp.concatenate([eu_mlp, er_mlp], axis=-1)
    for li in range(num_layers):
        h = jnp.maximum(h @ params[f"mlp_w{li}"] + params[f"mlp_b{li}"], 0.0)
    t = jnp.concatenate([gmf, h], axis=-1)
    pred = t @ params["predict_w"] + params["predict_b"]
    return pred.reshape(-1)


if __name__ == "__main__":
    factor_num = 16
    num_layers = 3
    dropout_rate = 0.0  # inference: dropout is identity

    # --- case 1: tiny single-tile problem (original toy sizes) ---
    number_user, number_restaurant = 10, 12
    batch = 8
    key = jax.random.PRNGKey(0)
    pkey, ukey, rkey = jax.random.split(key, 3)
    params = init_params(pkey, number_user, number_restaurant,
                         factor_num, num_layers)
    user = jax.random.randint(ukey, (batch,), 0, number_user, dtype=jnp.int32)
    re = jax.random.randint(rkey, (batch,), 0, number_restaurant, dtype=jnp.int32)

    fwd = jax.jit(functools.partial(
        ncf_forward, num_layers=num_layers, factor_num=factor_num))
    out = jax.block_until_ready(fwd(user, re, params))
    ref = ncf_reference(user, re, params, num_layers=num_layers)
    assert out.shape == (batch,)
    assert jnp.allclose(out, ref, atol=5e-3, rtol=5e-2), (out, ref)

    # --- case 2: multi-tile batch (exercises the pipelined, parallel grid) ---
    batch2, nu2, nr2 = 384, 50, 60
    p2 = init_params(jax.random.PRNGKey(1), nu2, nr2, factor_num, num_layers)
    u2 = jax.random.randint(jax.random.PRNGKey(2), (batch2,), 0, nu2,
                            dtype=jnp.int32)
    r2 = jax.random.randint(jax.random.PRNGKey(3), (batch2,), 0, nr2,
                            dtype=jnp.int32)
    fwd2 = jax.jit(functools.partial(
        ncf_forward, num_layers=num_layers, factor_num=factor_num, tile_b=128))
    out2 = jax.block_until_ready(fwd2(u2, r2, p2))
    ref2 = ncf_reference(u2, r2, p2, num_layers=num_layers)
    assert out2.shape == (batch2,)
    assert jnp.allclose(out2, ref2, atol=5e-3, rtol=5e-2), (out2, ref2)

    print("KERNEL_OK")
</pallas_src>

<mosaic_0001>
module attributes {stable_mosaic.version = 11 : i64} {
  func.func @kernel(%arg0: i32, %arg1: memref<8x16xbf16, #tpu.memory_space<vmem>>, %arg2: memref<8x16xbf16, #tpu.memory_space<vmem>>, %arg3: memref<8x64xbf16, #tpu.memory_space<vmem>>, %arg4: memref<8x64xbf16, #tpu.memory_space<vmem>>, %arg5: memref<64x64xbf16, #tpu.memory_space<vmem>>, %arg6: memref<64x64xbf16, #tpu.memory_space<vmem>>, %arg7: memref<1x64xf32, #tpu.memory_space<vmem>>, %arg8: memref<64x32xbf16, #tpu.memory_space<vmem>>, %arg9: memref<1x32xf32, #tpu.memory_space<vmem>>, %arg10: memref<32x16xbf16, #tpu.memory_space<vmem>>, %arg11: memref<1x16xf32, #tpu.memory_space<vmem>>, %arg12: memref<1x16xbf16, #tpu.memory_space<vmem>>, %arg13: memref<1x16xbf16, #tpu.memory_space<vmem>>, %arg14: memref<1x1xf32, #tpu.memory_space<vmem>>, %arg15: memref<1x8xf32, #tpu.memory_space<vmem>>) attributes {dimension_semantics = [#tpu.dimension_semantics<parallel>], iteration_bounds = array<i64: 1>, scalar_prefetch = 0 : i64, scratch_operands = 0 : i64, tpu.core_type = #tpu.core_type<tc>, window_params = [{transform_indices = @transform_0, window_bounds = array<i64: 8, 16>}, {transform_indices = @transform_1, window_bounds = array<i64: 8, 16>}, {transform_indices = @transform_2, window_bounds = array<i64: 8, 64>}, {transform_indices = @transform_3, window_bounds = array<i64: 8, 64>}, {pipeline_mode = #tpu.pipeline_mode<synchronous>, transform_indices = @transform_4, window_bounds = array<i64: 64, 64>}, {pipeline_mode = #tpu.pipeline_mode<synchronous>, transform_indices = @transform_5, window_bounds = array<i64: 64, 64>}, {pipeline_mode = #tpu.pipeline_mode<synchronous>, transform_indices = @transform_6, window_bounds = array<i64: 1, 64>}, {pipeline_mode = #tpu.pipeline_mode<synchronous>, transform_indices = @transform_7, window_bounds = array<i64: 64, 32>}, {pipeline_mode = #tpu.pipeline_mode<synchronous>, transform_indices = @transform_8, window_bounds = array<i64: 1, 32>}, {pipeline_mode = #tpu.pipeline_mode<synchronous>, transform_indices = @transform_9, window_bounds = array<i64: 32, 16>}, {pipeline_mode = #tpu.pipeline_mode<synchronous>, transform_indices = @transform_10, window_bounds = array<i64: 1, 16>}, {pipeline_mode = #tpu.pipeline_mode<synchronous>, transform_indices = @transform_11, window_bounds = array<i64: 1, 16>}, {pipeline_mode = #tpu.pipeline_mode<synchronous>, transform_indices = @transform_12, window_bounds = array<i64: 1, 16>}, {pipeline_mode = #tpu.pipeline_mode<synchronous>, transform_indices = @transform_13, window_bounds = array<i64: 1, 1>}, {transform_indices = @transform_14, window_bounds = array<i64: 1, 8>}]} {
    %c0 = arith.constant 0 : index
    %c0_0 = arith.constant 0 : index
    %0 = vector.load %arg1[%c0, %c0_0] : memref<8x16xbf16, #tpu.memory_space<vmem>>, vector<8x16xbf16>
    %c0_1 = arith.constant 0 : index
    %c0_2 = arith.constant 0 : index
    %1 = vector.load %arg2[%c0_1, %c0_2] : memref<8x16xbf16, #tpu.memory_space<vmem>>, vector<8x16xbf16>
    %2 = arith.mulf %0, %1 : vector<8x16xbf16>
    %c0_3 = arith.constant 0 : index
    %c0_4 = arith.constant 0 : index
    %3 = vector.load %arg3[%c0_3, %c0_4] : memref<8x64xbf16, #tpu.memory_space<vmem>>, vector<8x64xbf16>
    %c0_5 = arith.constant 0 : index
    %c0_6 = arith.constant 0 : index
    %4 = vector.load %arg5[%c0_5, %c0_6] : memref<64x64xbf16, #tpu.memory_space<vmem>>, vector<64x64xbf16>
    %cst = arith.constant dense<0.000000e+00> : vector<8x64xf32>
    %5 = tpu.matmul %3, %4, %cst {dimension_numbers = #tpu.dot_dimension_numbers<[1], [0], [0], [1], [0, 0, 1, 1], [], []>} : vector<8x64xbf16>, vector<64x64xbf16>, vector<8x64xf32> -> vector<8x64xf32>
    %c0_7 = arith.constant 0 : index
    %c0_8 = arith.constant 0 : index
    %6 = vector.load %arg4[%c0_7, %c0_8] : memref<8x64xbf16, #tpu.memory_space<vmem>>, vector<8x64xbf16>
    %c0_9 = arith.constant 0 : index
    %c0_10 = arith.constant 0 : index
    %7 = vector.load %arg6[%c0_9, %c0_10] : memref<64x64xbf16, #tpu.memory_space<vmem>>, vector<64x64xbf16>
    %cst_11 = arith.constant dense<0.000000e+00> : vector<8x64xf32>
    %8 = tpu.matmul %6, %7, %cst_11 {dimension_numbers = #tpu.dot_dimension_numbers<[1], [0], [0], [1], [0, 0, 1, 1], [], []>} : vector<8x64xbf16>, vector<64x64xbf16>, vector<8x64xf32> -> vector<8x64xf32>
    %9 = arith.addf %5, %8 : vector<8x64xf32>
    %c0_12 = arith.constant 0 : index
    %c0_13 = arith.constant 0 : index
    %10 = vector.load %arg7[%c0_12, %c0_13] : memref<1x64xf32, #tpu.memory_space<vmem>>, vector<1x64xf32>
    %11 = vector.broadcast %10 : vector<1x64xf32> to vector<8x64xf32>
    %12 = arith.addf %9, %11 : vector<8x64xf32>
    %cst_14 = arith.constant 0.000000e+00 : f32
    %13 = vector.broadcast %cst_14 : f32 to vector<8x64xf32>
    %14 = arith.maximumf %12, %13 : vector<8x64xf32>
    %15 = arith.truncf %14 : vector<8x64xf32> to vector<8x64xbf16>
    %c0_15 = arith.constant 0 : index
    %c0_16 = arith.constant 0 : index
    %16 = vector.load %arg8[%c0_15, %c0_16] : memref<64x32xbf16, #tpu.memory_space<vmem>>, vector<64x32xbf16>
    %cst_17 = arith.constant dense<0.000000e+00> : vector<8x32xf32>
    %17 = tpu.matmul %15, %16, %cst_17 {dimension_numbers = #tpu.dot_dimension_numbers<[1], [0], [0], [1], [0, 0, 1, 1], [], []>} : vector<8x64xbf16>, vector<64x32xbf16>, vector<8x32xf32> -> vector<8x32xf32>
    %c0_18 = arith.constant 0 : index
    %c0_19 = arith.constant 0 : index
    %18 = vector.load %arg9[%c0_18, %c0_19] : memref<1x32xf32, #tpu.memory_space<vmem>>, vector<1x32xf32>
    %19 = vector.broadcast %18 : vector<1x32xf32> to vector<8x32xf32>
    %20 = arith.addf %17, %19 : vector<8x32xf32>
    %cst_20 = arith.constant 0.000000e+00 : f32
    %21 = vector.broadcast %cst_20 : f32 to vector<8x32xf32>
    %22 = arith.maximumf %20, %21 : vector<8x32xf32>
    %23 = arith.truncf %22 : vector<8x32xf32> to vector<8x32xbf16>
    %c0_21 = arith.constant 0 : index
    %c0_22 = arith.constant 0 : index
    %24 = vector.load %arg10[%c0_21, %c0_22] : memref<32x16xbf16, #tpu.memory_space<vmem>>, vector<32x16xbf16>
    %cst_23 = arith.constant dense<0.000000e+00> : vector<8x16xf32>
    %25 = tpu.matmul %23, %24, %cst_23 {dimension_numbers = #tpu.dot_dimension_numbers<[1], [0], [0], [1], [0, 0, 1, 1], [], []>} : vector<8x32xbf16>, vector<32x16xbf16>, vector<8x16xf32> -> vector<8x16xf32>
    %c0_24 = arith.constant 0 : index
    %c0_25 = arith.constant 0 : index
    %26 = vector.load %arg11[%c0_24, %c0_25] : memref<1x16xf32, #tpu.memory_space<vmem>>, vector<1x16xf32>
    %27 = vector.broadcast %26 : vector<1x16xf32> to vector<8x16xf32>
    %28 = arith.addf %25, %27 : vector<8x16xf32>
    %cst_26 = arith.constant 0.000000e+00 : f32
    %29 = vector.broadcast %cst_26 : f32 to vector<8x16xf32>
    %30 = arith.maximumf %28, %29 : vector<8x16xf32>
    %c0_27 = arith.constant 0 : index
    %c0_28 = arith.constant 0 : index
    %31 = vector.load %arg12[%c0_27, %c0_28] : memref<1x16xbf16, #tpu.memory_space<vmem>>, vector<1x16xbf16>
    %cst_29 = arith.constant dense<0.000000e+00> : vector<1x8xf32>
    %32 = tpu.matmul %31, %2, %cst_29 {dimension_numbers = #tpu.dot_dimension_numbers<[1], [1], [0], [0], [0, 0, 1, 0], [], []>} : vector<1x16xbf16>, vector<8x16xbf16>, vector<1x8xf32> -> vector<1x8xf32>
    %c0_30 = arith.constant 0 : index
    %c0_31 = arith.constant 0 : index
    %33 = vector.load %arg13[%c0_30, %c0_31] : memref<1x16xbf16, #tpu.memory_space<vmem>>, vector<1x16xbf16>
    %34 = arith.truncf %30 : vector<8x16xf32> to vector<8x16xbf16>
    %cst_32 = arith.constant dense<0.000000e+00> : vector<1x8xf32>
    %35 = tpu.matmul %33, %34, %cst_32 {dimension_numbers = #tpu.dot_dimension_numbers<[1], [1], [0], [0], [0, 0, 1, 0], [], []>} : vector<1x16xbf16>, vector<8x16xbf16>, vector<1x8xf32> -> vector<1x8xf32>
    %36 = arith.addf %32, %35 : vector<1x8xf32>
    %c0_33 = arith.constant 0 : index
    %c0_34 = arith.constant 0 : index
    %37 = vector.load %arg14[%c0_33, %c0_34] : memref<1x1xf32, #tpu.memory_space<vmem>>, vector<1x1xf32>
    %38 = vector.broadcast %37 : vector<1x1xf32> to vector<1x8xf32>
    %39 = arith.addf %36, %38 : vector<1x8xf32>
    %c0_35 = arith.constant 0 : index
    %c0_36 = arith.constant 0 : index
    %40 = vector.load %arg15[%c0_35, %c0_36] : memref<1x8xf32, #tpu.memory_space<vmem>>, vector<1x8xf32>
    tpu.vector_store %arg15[%c0_35, %c0_36], %39 {strides = array<i32>} : memref<1x8xf32, #tpu.memory_space<vmem>>, vector<1x8xf32>,
    return
  }
  func.func @transform_0(%arg0: i32) -> (i32, i32) {
    %c0_i32 = arith.constant 0 : i32
    %c0_i32_0 = arith.constant 0 : i32
    return %arg0, %c0_i32 : i32, i32
  }
  func.func @transform_1(%arg0: i32) -> (i32, i32) {
    %c0_i32 = arith.constant 0 : i32
    %c0_i32_0 = arith.constant 0 : i32
    return %arg0, %c0_i32 : i32, i32
  }
  func.func @transform_2(%arg0: i32) -> (i32, i32) {
    %c0_i32 = arith.constant 0 : i32
    %c0_i32_0 = arith.constant 0 : i32
    return %arg0, %c0_i32 : i32, i32
  }
  func.func @transform_3(%arg0: i32) -> (i32, i32) {
    %c0_i32 = arith.constant 0 : i32
    %c0_i32_0 = arith.constant 0 : i32
    return %arg0, %c0_i32 : i32, i32
  }
  func.func @transform_4(%arg0: i32) -> (i32, i32) {
    %c0_i32 = arith.constant 0 : i32
    %c0_i32_0 = arith.constant 0 : i32
    %c0_i32_1 = arith.constant 0 : i32
    return %c0_i32, %c0_i32_0 : i32, i32
  }
  func.func @transform_5(%arg0: i32) -> (i32, i32) {
    %c0_i32 = arith.constant 0 : i32
    %c0_i32_0 = arith.constant 0 : i32
    %c0_i32_1 = arith.constant 0 : i32
    return %c0_i32, %c0_i32_0 : i32, i32
  }
  func.func @transform_6(%arg0: i32) -> (i32, i32) {
    %c0_i32 = arith.constant 0 : i32
    %c0_i32_0 = arith.constant 0 : i32
    %c0_i32_1 = arith.constant 0 : i32
    return %c0_i32, %c0_i32_0 : i32, i32
  }
  func.func @transform_7(%arg0: i32) -> (i32, i32) {
    %c0_i32 = arith.constant 0 : i32
    %c0_i32_0 = arith.constant 0 : i32
    %c0_i32_1 = arith.constant 0 : i32
    return %c0_i32, %c0_i32_0 : i32, i32
  }
  func.func @transform_8(%arg0: i32) -> (i32, i32) {
    %c0_i32 = arith.constant 0 : i32
    %c0_i32_0 = arith.constant 0 : i32
    %c0_i32_1 = arith.constant 0 : i32
    return %c0_i32, %c0_i32_0 : i32, i32
  }
  func.func @transform_9(%arg0: i32) -> (i32, i32) {
    %c0_i32 = arith.constant 0 : i32
    %c0_i32_0 = arith.constant 0 : i32
    %c0_i32_1 = arith.constant 0 : i32
    return %c0_i32, %c0_i32_0 : i32, i32
  }
  func.func @transform_10(%arg0: i32) -> (i32, i32) {
    %c0_i32 = arith.constant 0 : i32
    %c0_i32_0 = arith.constant 0 : i32
    %c0_i32_1 = arith.constant 0 : i32
    return %c0_i32, %c0_i32_0 : i32, i32
  }
  func.func @transform_11(%arg0: i32) -> (i32, i32) {
    %c0_i32 = arith.constant 0 : i32
    %c0_i32_0 = arith.constant 0 : i32
    %c0_i32_1 = arith.constant 0 : i32
    return %c0_i32, %c0_i32_0 : i32, i32
  }
  func.func @transform_12(%arg0: i32) -> (i32, i32) {
    %c0_i32 = arith.constant 0 : i32
    %c0_i32_0 = arith.constant 0 : i32
    %c0_i32_1 = arith.constant 0 : i32
    return %c0_i32, %c0_i32_0 : i32, i32
  }
  func.func @transform_13(%arg0: i32) -> (i32, i32) {
    %c0_i32 = arith.constant 0 : i32
    %c0_i32_0 = arith.constant 0 : i32
    %c0_i32_1 = arith.constant 0 : i32
    return %c0_i32, %c0_i32_0 : i32, i32
  }
  func.func @transform_14(%arg0: i32) -> (i32, i32) {
    %c0_i32 = arith.constant 0 : i32
    %c0_i32_0 = arith.constant 0 : i32
    return %c0_i32, %arg0 : i32, i32
  }
}

</mosaic_0001>

<llo_original>
// kernel: ncf_forward.1
$region0: #{ncf_forward.1}
  #allocation0 [shape = 'u32[]', space=smem, size = 0x4, offset = 0x4, fixed_abs, tag = 'smem constant byte address 0x4 - core index']
  #allocation1 [shape = 'u32[144,128]{1,0:T(1,128)}', space=vmem, size = 0x12000, scoped, tag = 'internal scratch']
  #allocation2 [shape = 'f32[1,1]{1,0:T(1,128)S(1)}', space=vmem, size = 0x200, scoped, tag = 'scoped memory for ncf_forward.1']
  %s0 = inlined_call_operand.vmem [shape: bf16[8,16], index: 0, kind: input, shape index: {}]
  %s1 = inlined_call_operand.vmem [shape: bf16[8,16], index: 1, kind: input, shape index: {}]
  %s2 = inlined_call_operand.vmem [shape: bf16[8,64], index: 2, kind: input, shape index: {}]
  %s3 = inlined_call_operand.vmem [shape: bf16[8,64], index: 3, kind: input, shape index: {}]
  %s4 = inlined_call_operand.vmem [shape: bf16[64,64], index: 4, kind: input, shape index: {}]
  %s5 = inlined_call_operand.vmem [shape: bf16[64,64], index: 5, kind: input, shape index: {}]
  %s6 = inlined_call_operand.vmem [shape: f32[1,64], index: 6, kind: input, shape index: {}]
  %s7 = inlined_call_operand.vmem [shape: bf16[64,32], index: 7, kind: input, shape index: {}]
  %s8 = inlined_call_operand.vmem [shape: f32[1,32], index: 8, kind: input, shape index: {}]
  %s9 = inlined_call_operand.vmem [shape: bf16[32,16], index: 9, kind: input, shape index: {}]
  %s10 = inlined_call_operand.vmem [shape: f32[1,16], index: 10, kind: input, shape index: {}]
  %s11 = inlined_call_operand.vmem [shape: bf16[1,16], index: 11, kind: input, shape index: {}]
  %s12 = inlined_call_operand.vmem [shape: bf16[1,16], index: 12, kind: input, shape index: {}]
  %s13 = inlined_call_operand.<no memory space> [shape: f32[1,1], index: 13, kind: input, shape index: {}]
  %s14 = inlined_call_operand.hbm [shape: f32[1,8], index: 14, kind: output, shape index: {}]
  %s15 = sld [smem:[#allocation0]]
  $region66: #{ncf_forward.1} parent=0
    _
  %s17 = ssub.s32 1, %s15
  %s18 = scalar_select 0, %s17, %s15
  %v19 = vstv %s13
  %20 = vst [vmem:[#allocation2] sm:$0x1] %v19
  $region1: #{ncf_forward.1} parent=0
    #allocation3 [shape = 'u8[512]{0}', space=vmem, size = 0x400, scoped, tag = 'output window, operand 0, single buffered']
    #allocation4 [shape = 's32[1]{0}', space=sflag, size = 0x4, scoped, tag = 'scoped memory for ncf_forward.1']
    %21 = vsyncpa [#allocation4], 0
    // Predicated region
    $region2: #{ncf_forward.1} parent=1 // pred_check
      _
    $region3: #{ncf_forward.1} parent=1 // pred_check_branch
      %23 = sbr.rel (0) target = $region5
    $region4: #{ncf_forward.1} parent=1 // pred_region
      _
    $region5: #{ncf_forward.1} parent=1 // pred_fallthru
      _
    // Predicated region
    $region6: #{ncf_forward.1} parent=1 // pred_check
      _
    $region7: #{ncf_forward.1} parent=1 // pred_check_branch
      %25 = sbr.rel (0) target = $region9
    $region8: #{ncf_forward.1} parent=1 // pred_region
      _
    $region9: #{ncf_forward.1} parent=1 // pred_fallthru
      _
    // Predicated region
    $region10: #{ncf_forward.1} parent=1 // pred_check
      _
    $region11: #{ncf_forward.1} parent=1 // pred_check_branch
      %27 = sbr.rel (0) target = $region13
    $region12: #{ncf_forward.1} parent=1 // pred_region
      _
    $region13: #{ncf_forward.1} parent=1 // pred_fallthru
      _
    // Predicated region
    $region14: #{ncf_forward.1} parent=1 // pred_check
      _
    $region15: #{ncf_forward.1} parent=1 // pred_check_branch
      %29 = sbr.rel (0) target = $region17
    $region16: #{ncf_forward.1} parent=1 // pred_region
      _
    $region17: #{ncf_forward.1} parent=1 // pred_fallthru
      _
    // Predicated region
    $region18: #{ncf_forward.1} parent=1 // pred_check
      _
    $region19: #{ncf_forward.1} parent=1 // pred_check_branch
      %31 = sbr.rel (0) target = $region21
    $region20: #{ncf_forward.1} parent=1 // pred_region
      _
    $region21: #{ncf_forward.1} parent=1 // pred_fallthru
      _
    // Predicated region
    $region22: #{ncf_forward.1} parent=1 // pred_check
      _
    $region23: #{ncf_forward.1} parent=1 // pred_check_branch
      %33 = sbr.rel (0) target = $region25
    $region24: #{ncf_forward.1} parent=1 // pred_region
      _
    $region25: #{ncf_forward.1} parent=1 // pred_fallthru
      _
    // Predicated region
    $region26: #{ncf_forward.1} parent=1 // pred_check
      _
    $region27: #{ncf_forward.1} parent=1 // pred_check_branch
      %35 = sbr.rel (0) target = $region29
    $region28: #{ncf_forward.1} parent=1 // pred_region
      _
    $region29: #{ncf_forward.1} parent=1 // pred_fallthru
      _
    // Predicated region
    $region30: #{ncf_forward.1} parent=1 // pred_check
      _
    $region31: #{ncf_forward.1} parent=1 // pred_check_branch
      %37 = sbr.rel (0) target = $region33
    $region32: #{ncf_forward.1} parent=1 // pred_region
      _
    $region33: #{ncf_forward.1} parent=1 // pred_fallthru
      _
    // Predicated region
    $region34: #{ncf_forward.1} parent=1 // pred_check
      _
    $region35: #{ncf_forward.1} parent=1 // pred_check_branch
      %39 = sbr.rel (0) target = $region37
    $region36: #{ncf_forward.1} parent=1 // pred_region
      _
    $region37: #{ncf_forward.1} parent=1 // pred_fallthru
      _
    // Predicated region
    $region38: #{ncf_forward.1} parent=1 // pred_check
      _
    $region39: #{ncf_forward.1} parent=1 // pred_check_branch
      %41 = sbr.rel (0) target = $region41
    $region40: #{ncf_forward.1} parent=1 // pred_region
      _
    $region41: #{ncf_forward.1} parent=1 // pred_fallthru
      _
    // Predicated region
    $region42: #{ncf_forward.1} parent=1 // pred_check
      _
    $region43: #{ncf_forward.1} parent=1 // pred_check_branch
      %43 = sbr.rel (0) target = $region45
    $region44: #{ncf_forward.1} parent=1 // pred_region
      _
    $region45: #{ncf_forward.1} parent=1 // pred_fallthru
      _
    // Predicated region
    $region46: #{ncf_forward.1} parent=1 // pred_check
      _
    $region47: #{ncf_forward.1} parent=1 // pred_check_branch
      %45 = sbr.rel (0) target = $region49
    $region48: #{ncf_forward.1} parent=1 // pred_region
      _
    $region49: #{ncf_forward.1} parent=1 // pred_fallthru
      _
    // Predicated region
    $region50: #{ncf_forward.1} parent=1 // pred_check
      _
    $region51: #{ncf_forward.1} parent=1 // pred_check_branch
      %47 = sbr.rel (0) target = $region53
    $region52: #{ncf_forward.1} parent=1 // pred_region
      _
    $region53: #{ncf_forward.1} parent=1 // pred_fallthru
      _
    // Predicated region
    $region54: #{ncf_forward.1} parent=1 // pred_check
      _
    $region55: #{ncf_forward.1} parent=1 // pred_check_branch
      %49 = sbr.rel (0) target = $region57
    $region56: #{ncf_forward.1} parent=1 // pred_region
      _
    $region57: #{ncf_forward.1} parent=1 // pred_fallthru
      _
    %v51 = vld [vmem:[%s0] sm:$0xf]
    %v52 = vld [vmem:[%s1] sm:$0xf]
    %v53 = vmul.bf16 %v51, %v52
    %v54 = vld [vmem:[%s2] sm:$0xf]
    %v55 = vld [vmem:[%s4] sm:$0xf]
    %v56 = vld [vmem:[%s4 + $0x4] sm:$0xf]
    %v57 = vld [vmem:[%s4 + $0x8] sm:$0xf]
    %v58 = vld [vmem:[%s4 + $0xc] sm:$0xf]
    %v59 = vld [vmem:[%s4 + $0x10] sm:$0xf]
    %v60 = vld [vmem:[%s4 + $0x14] sm:$0xf]
    %v61 = vld [vmem:[%s4 + $0x18] sm:$0xf]
    %v62 = vld [vmem:[%s4 + $0x1c] sm:$0xf]
    %v63 = vld [vmem:[%s3] sm:$0xf]
    %v64 = vld [vmem:[%s5] sm:$0xf]
    %v65 = vld [vmem:[%s5 + $0x4] sm:$0xf]
    %v66 = vld [vmem:[%s5 + $0x8] sm:$0xf]
    %v67 = vld [vmem:[%s5 + $0xc] sm:$0xf]
    %v68 = vld [vmem:[%s5 + $0x10] sm:$0xf]
    %v69 = vld [vmem:[%s5 + $0x14] sm:$0xf]
    %v70 = vld [vmem:[%s5 + $0x18] sm:$0xf]
    %v71 = vld [vmem:[%s5 + $0x1c] sm:$0xf]
    %v80 = vunpack.c.l.b16 %v64
    %v81 = vunpack.c.l.b16 %v65
    %v82 = vunpack.c.l.b16 %v66
    %v83 = vunpack.c.l.b16 %v67
    %v84 = vunpack.c.l.b16 %v68
    %v85 = vunpack.c.l.b16 %v69
    %v86 = vunpack.c.l.b16 %v70
    %v87 = vunpack.c.l.b16 %v71
    %v88 = vpack.c.b16 %v81, %v80
    %v89 = vpack.c.b16 %v83, %v82
    %v90 = vpack.c.b16 %v85, %v84
    %v91 = vpack.c.b16 %v87, %v86
    %vm96 = vcmask 523264
    %v98 = vsel %vm96, %v63, 0
    %100 = vmatprep.subr.bf16.mxu0 0
    %101 = vmatpush1.bf16.msra.mxu0 0
    %102 = vmatprep.subr.bf16.mxu0 0
    %103 = vmatpush1.bf16.msra.mxu0 0
    %104 = vmatprep.subr.bf16.mxu0 0
    %105 = vmatpush1.bf16.msra.mxu0 0
    %106 = vmatprep.subr.bf16.mxu0 0
    %107 = vmatpush1.bf16.msra.mxu0 0
    %108 = vmatprep.subr.bf16.mxu0 0
    %109 = vmatpush1.bf16.msra.mxu0 %v91
    %110 = vmatprep.subr.bf16.mxu0 0
    %111 = vmatpush1.bf16.msra.mxu0 %v90
    %112 = vmatprep.subr.bf16.mxu0 0
    %113 = vmatpush1.bf16.msra.mxu0 %v89
    %114 = vmatprep.subr.bf16.mxu0 0
    %115 = vmatpush1.bf16.msra.mxu0 %v88
    %116 = vmatprep.subr.bf16.mxu0 0
    %117 = vmatpush2.bf16.msra.mxu0 0
    %118 = vmatprep.subr.bf16.mxu0 0
    %119 = vmatpush2.bf16.msra.mxu0 0
    %120 = vmatprep.subr.bf16.mxu0 0
    %121 = vmatpush2.bf16.msra.mxu0 0
    %122 = vmatprep.subr.bf16.mxu0 0
    %123 = vmatpush2.bf16.msra.mxu0 0
    %124 = vmatprep.subr.bf16.mxu0 0
    %125 = vmatpush2.bf16.msra.mxu0 0
    %126 = vmatprep.subr.bf16.mxu0 0
    %127 = vmatpush2.bf16.msra.mxu0 0
    %128 = vmatprep.subr.bf16.mxu0 0
    %129 = vmatpush2.bf16.msra.mxu0 0
    %130 = vmatprep.subr.bf16.mxu0 0
    %131 = vmatpush2.bf16.msra.mxu0 0
    %132 = vmatprep.mubr.bf16.mxu0 0
    %133 = vmatmul.mubr.bf16.gmra.mxu0 %v98
    %v134 = vpop.f32.mrf.mxu0
    %v135 = vadd.f32 0.0, %v134
    %v136 = vpop.f32.mrf.mxu0
    %v137 = vpop.f32.mrf.mxu0
    %v138 = vpop.f32.mrf.mxu0
    %139 = vdwg.mxu0
    %v148 = vunpack.c.l.b16 %v55
    %v149 = vunpack.c.l.b16 %v56
    %v150 = vunpack.c.l.b16 %v57
    %v151 = vunpack.c.l.b16 %v58
    %v152 = vunpack.c.l.b16 %v59
    %v153 = vunpack.c.l.b16 %v60
    %v154 = vunpack.c.l.b16 %v61
    %v155 = vunpack.c.l.b16 %v62
    %v156 = vpack.c.b16 %v149, %v148
    %v157 = vpack.c.b16 %v151, %v150
    %v158 = vpack.c.b16 %v153, %v152
    %v159 = vpack.c.b16 %v155, %v154
    %v165 = vsel %vm96, %v54, 0
    %167 = vmatprep.subr.bf16.mxu0 0
    %168 = vmatpush1.bf16.msra.mxu0 0
    %169 = vmatprep.subr.bf16.mxu0 0
    %170 = vmatpush1.bf16.msra.mxu0 0
    %171 = vmatprep.subr.bf16.mxu0 0
    %172 = vmatpush1.bf16.msra.mxu0 0
    %173 = vmatprep.subr.bf16.mxu0 0
    %174 = vmatpush1.bf16.msra.mxu0 0
    %175 = vmatprep.subr.bf16.mxu0 0
    %176 = vmatpush1.bf16.msra.mxu0 %v159
    %177 = vmatprep.subr.bf16.mxu0 0
    %178 = vmatpush1.bf16.msra.mxu0 %v158
    %179 = vmatprep.subr.bf16.mxu0 0
    %180 = vmatpush1.bf16.msra.mxu0 %v157
    %181 = vmatprep.subr.bf16.mxu0 0
    %182 = vmatpush1.bf16.msra.mxu0 %v156
    %183 = vmatprep.subr.bf16.mxu0 0
    %184 = vmatpush2.bf16.msra.mxu0 0
    %185 = vmatprep.subr.bf16.mxu0 0
    %186 = vmatpush2.bf16.msra.mxu0 0
    %187 = vmatprep.subr.bf16.mxu0 0
    %188 = vmatpush2.bf16.msra.mxu0 0
    %189 = vmatprep.subr.bf16.mxu0 0
    %190 = vmatpush2.bf16.msra.mxu0 0
    %191 = vmatprep.subr.bf16.mxu0 0
    %192 = vmatpush2.bf16.msra.mxu0 0
    %193 = vmatprep.subr.bf16.mxu0 0
    %194 = vmatpush2.bf16.msra.mxu0 0
    %195 = vmatprep.subr.bf16.mxu0 0
    %196 = vmatpush2.bf16.msra.mxu0 0
    %197 = vmatprep.subr.bf16.mxu0 0
    %198 = vmatpush2.bf16.msra.mxu0 0
    %199 = vmatprep.mubr.bf16.mxu0 0
    %200 = vmatmul.mubr.bf16.gmra.mxu0 %v165
    %v201 = vpop.f32.mrf.mxu0
    %v202 = vadd.f32 %v135, %v201
    %v203 = vpop.f32.mrf.mxu0
    %v204 = vpop.f32.mrf.mxu0
    %v205 = vpop.f32.mrf.mxu0
    %206 = vdwg.mxu0
    %v207 = vld [vmem:[%s6] sm:$0x1]
    %v209 = vlaneseq
    %v210 = vshrl.u32 %v209, 7
    %v211 = vsub.s32 0, %v210
    %v212 = vrot.slane %v207, %v211
    %v214 = vadd.f32 %v202, %v212
    %v215 = vmax.f32 %v214, 0.0
    %v216 = vpack.c.bf16 %v215, %v215
    %v217 = vld [vmem:[%s7] sm:$0xf]
    %v218 = vld [vmem:[%s7 + $0x4] sm:$0xf]
    %v219 = vld [vmem:[%s7 + $0x8] sm:$0xf]
    %v220 = vld [vmem:[%s7 + $0xc] sm:$0xf]
    %v221 = vld [vmem:[%s7 + $0x10] sm:$0xf]
    %v222 = vld [vmem:[%s7 + $0x14] sm:$0xf]
    %v223 = vld [vmem:[%s7 + $0x18] sm:$0xf]
    %v224 = vld [vmem:[%s7 + $0x1c] sm:$0xf]
    %v225 = vld [vmem:[%s8] sm:$0x1]
    %v227 = vlaneseq
    %v228 = vshrl.u32 %v227, 7
    %v229 = vsub.s32 0, %v228
    %v230 = vrot.slane %v225, %v229
    %v240 = vunpack.c.l.b16 %v217
    %v241 = vunpack.c.l.b16 %v218
    %v242 = vunpack.c.l.b16 %v219
    %v243 = vunpack.c.l.b16 %v220
    %v244 = vunpack.c.l.b16 %v221
    %v245 = vunpack.c.l.b16 %v222
    %v246 = vunpack.c.l.b16 %v223
    %v247 = vunpack.c.l.b16 %v224
    %v248 = vpack.c.b16 %v241, %v240
    %v249 = vpack.c.b16 %v243, %v242
    %v250 = vpack.c.b16 %v245, %v244
    %v251 = vpack.c.b16 %v247, %v246
    %v257 = vsel %vm96, %v216, 0
    %259 = vmatprep.subr.bf16.mxu0 0
    %260 = vmatpush1.bf16.msra.mxu0 0
    %261 = vmatprep.subr.bf16.mxu0 0
    %262 = vmatpush1.bf16.msra.mxu0 0
    %263 = vmatprep.subr.bf16.mxu0 0
    %264 = vmatpush1.bf16.msra.mxu0 0
    %265 = vmatprep.subr.bf16.mxu0 0
    %266 = vmatpush1.bf16.msra.mxu0 0
    %267 = vmatprep.subr.bf16.mxu0 0
    %268 = vmatpush1.bf16.msra.mxu0 %v251
    %269 = vmatprep.subr.bf16.mxu0 0
    %270 = vmatpush1.bf16.msra.mxu0 %v250
    %271 = vmatprep.subr.bf16.mxu0 0
    %272 = vmatpush1.bf16.msra.mxu0 %v249
    %273 = vmatprep.subr.bf16.mxu0 0
    %274 = vmatpush1.bf16.msra.mxu0 %v248
    %275 = vmatprep.subr.bf16.mxu0 0
    %276 = vmatpush2.bf16.msra.mxu0 0
    %277 = vmatprep.subr.bf16.mxu0 0
    %278 = vmatpush2.bf16.msra.mxu0 0
    %279 = vmatprep.subr.bf16.mxu0 0
    %280 = vmatpush2.bf16.msra.mxu0 0
    %281 = vmatprep.subr.bf16.mxu0 0
    %282 = vmatpush2.bf16.msra.mxu0 0
    %283 = vmatprep.subr.bf16.mxu0 0
    %284 = vmatpush2.bf16.msra.mxu0 0
    %285 = vmatprep.subr.bf16.mxu0 0
    %286 = vmatpush2.bf16.msra.mxu0 0
    %287 = vmatprep.subr.bf16.mxu0 0
    %288 = vmatpush2.bf16.msra.mxu0 0
    %289 = vmatprep.subr.bf16.mxu0 0
    %290 = vmatpush2.bf16.msra.mxu0 0
    %291 = vmatprep.mubr.bf16.mxu0 0
    %292 = vmatmul.mubr.bf16.gmra.mxu0 %v257
    %v293 = vpop.f32.mrf.mxu0
    %v294 = vadd.f32 %v230, %v293
    %v295 = vpop.f32.mrf.mxu0
    %v296 = vpop.f32.mrf.mxu0
    %v297 = vpop.f32.mrf.mxu0
    %298 = vdwg.mxu0
    %v299 = vmax.f32 %v294, 0.0
    %v300 = vpack.c.bf16 %v299, %v299
    %v301 = vld [vmem:[%s9] sm:$0xf]
    %v302 = vld [vmem:[%s9 + $0x4] sm:$0xf]
    %v303 = vld [vmem:[%s9 + $0x8] sm:$0xf]
    %v304 = vld [vmem:[%s9 + $0xc] sm:$0xf]
    %v305 = vld [vmem:[%s10] sm:$0x1]
    %v307 = vlaneseq
    %v308 = vshrl.u32 %v307, 7
    %v309 = vsub.s32 0, %v308
    %v310 = vrot.slane %v305, %v309
    %v316 = vunpack.c.l.b16 %v301
    %v317 = vunpack.c.l.b16 %v302
    %v318 = vunpack.c.l.b16 %v303
    %v319 = vunpack.c.l.b16 %v304
    %v320 = vpack.c.b16 %v317, %v316
    %v321 = vpack.c.b16 %v319, %v318
    %vm324 = vcmask 261120
    %v326 = vsel %vm324, %v300, 0
    %328 = vmatprep.subr.bf16.mxu0 0
    %329 = vmatpush1.bf16.msra.mxu0 0
    %330 = vmatprep.subr.bf16.mxu0 0
    %331 = vmatpush1.bf16.msra.mxu0 0
    %332 = vmatprep.subr.bf16.mxu0 0
    %333 = vmatpush1.bf16.msra.mxu0 0
    %334 = vmatprep.subr.bf16.mxu0 0
    %335 = vmatpush1.bf16.msra.mxu0 0
    %336 = vmatprep.subr.bf16.mxu0 0
    %337 = vmatpush1.bf16.msra.mxu0 0
    %338 = vmatprep.subr.bf16.mxu0 0
    %339 = vmatpush1.bf16.msra.mxu0 0
    %340 = vmatprep.subr.bf16.mxu0 0
    %341 = vmatpush1.bf16.msra.mxu0 %v321
    %342 = vmatprep.subr.bf16.mxu0 0
    %343 = vmatpush1.bf16.msra.mxu0 %v320
    %344 = vmatprep.subr.bf16.mxu0 0
    %345 = vmatpush2.bf16.msra.mxu0 0
    %346 = vmatprep.subr.bf16.mxu0 0
    %347 = vmatpush2.bf16.msra.mxu0 0
    %348 = vmatprep.subr.bf16.mxu0 0
    %349 = vmatpush2.bf16.msra.mxu0 0
    %350 = vmatprep.subr.bf16.mxu0 0
    %351 = vmatpush2.bf16.msra.mxu0 0
    %352 = vmatprep.subr.bf16.mxu0 0
    %353 = vmatpush2.bf16.msra.mxu0 0
    %354 = vmatprep.subr.bf16.mxu0 0
    %355 = vmatpush2.bf16.msra.mxu0 0
    %356 = vmatprep.subr.bf16.mxu0 0
    %357 = vmatpush2.bf16.msra.mxu0 0
    %358 = vmatprep.subr.bf16.mxu0 0
    %359 = vmatpush2.bf16.msra.mxu0 0
    %360 = vmatprep.mubr.bf16.mxu0 0
    %361 = vmatmul.mubr.bf16.gmra.mxu0 %v326
    %v362 = vpop.f32.mrf.mxu0
    %v363 = vadd.f32 %v310, %v362
    %v364 = vpop.f32.mrf.mxu0
    %v365 = vpop.f32.mrf.mxu0
    %v366 = vpop.f32.mrf.mxu0
    %367 = vdwg.mxu0
    %v368 = vmax.f32 %v363, 0.0
    %v369 = vld [vmem:[%s11] sm:$0x1]
    %v370 = vld [vmem:[%s12] sm:$0x1]
    %v371 = vpack.c.bf16 %v368, %v368
    %vm372 = vcmask 130048
    %v374 = vsel %vm372, %v370, 0
    %v377 = vsel %vm372, %v371, 0
    %379 = vmatprep.subr.bf16.mxu0 0
    %380 = vmatpush1.bf16.xpose.msra.mxu0 0
    %381 = vmatprep.subr.bf16.mxu0 0
    %382 = vmatpush1.bf16.xpose.msra.mxu0 0
    %383 = vmatprep.subr.bf16.mxu0 0
    %384 = vmatpush1.bf16.xpose.msra.mxu0 0
    %385 = vmatprep.subr.bf16.mxu0 0
    %386 = vmatpush1.bf16.xpose.msra.mxu0 0
    %387 = vmatprep.subr.bf16.mxu0 0
    %388 = vmatpush1.bf16.xpose.msra.mxu0 0
    %389 = vmatprep.subr.bf16.mxu0 0
    %390 = vmatpush1.bf16.xpose.msra.mxu0 0
    %391 = vmatprep.subr.bf16.mxu0 0
    %392 = vmatpush1.bf16.xpose.msra.mxu0 0
    %393 = vmatprep.subr.bf16.mxu0 0
    %394 = vmatpush1.bf16.xpose.msra.mxu0 %v377
    %395 = vmatprep.subr.bf16.mxu0 0
    %396 = vmatpush2.bf16.xpose.msra.mxu0 0
    %397 = vmatprep.subr.bf16.mxu0 0
    %398 = vmatpush2.bf16.xpose.msra.mxu0 0
    %399 = vmatprep.subr.bf16.mxu0 0
    %400 = vmatpush2.bf16.xpose.msra.mxu0 0
    %401 = vmatprep.subr.bf16.mxu0 0
    %402 = vmatpush2.bf16.xpose.msra.mxu0 0
    %403 = vmatprep.subr.bf16.mxu0 0
    %404 = vmatpush2.bf16.xpose.msra.mxu0 0
    %405 = vmatprep.subr.bf16.mxu0 0
    %406 = vmatpush2.bf16.xpose.msra.mxu0 0
    %407 = vmatprep.subr.bf16.mxu0 0
    %408 = vmatpush2.bf16.xpose.msra.mxu0 0
    %409 = vmatprep.subr.bf16.mxu0 0
    %410 = vmatpush2.bf16.xpose.msra.mxu0 0
    %411 = vmatprep.mubr.bf16.mxu0 0
    %412 = vmatmul.mubr.bf16.gmra.mxu0 %v374
    %v413 = vpop.f32.mrf.mxu0
    %v414 = vadd.f32 0.0, %v413
    %v415 = vpop.f32.mrf.mxu0
    %v416 = vpop.f32.mrf.mxu0
    %v417 = vpop.f32.mrf.mxu0
    %418 = vdwg.mxu0
    %v420 = vsel %vm372, %v369, 0
    %v423 = vsel %vm372, %v53, 0
    %425 = vmatprep.subr.bf16.mxu0 0
    %426 = vmatpush1.bf16.xpose.msra.mxu0 0
    %427 = vmatprep.subr.bf16.mxu0 0
    %428 = vmatpush1.bf16.xpose.msra.mxu0 0
    %429 = vmatprep.subr.bf16.mxu0 0
    %430 = vmatpush1.bf16.xpose.msra.mxu0 0
    %431 = vmatprep.subr.bf16.mxu0 0
    %432 = vmatpush1.bf16.xpose.msra.mxu0 0
    %433 = vmatprep.subr.bf16.mxu0 0
    %434 = vmatpush1.bf16.xpose.msra.mxu0 0
    %435 = vmatprep.subr.bf16.mxu0 0
    %436 = vmatpush1.bf16.xpose.msra.mxu0 0
    %437 = vmatprep.subr.bf16.mxu0 0
    %438 = vmatpush1.bf16.xpose.msra.mxu0 0
    %439 = vmatprep.subr.bf16.mxu0 0
    %440 = vmatpush1.bf16.xpose.msra.mxu0 %v423
    %441 = vmatprep.subr.bf16.mxu0 0
    %442 = vmatpush2.bf16.xpose.msra.mxu0 0
    %443 = vmatprep.subr.bf16.mxu0 0
    %444 = vmatpush2.bf16.xpose.msra.mxu0 0
    %445 = vmatprep.subr.bf16.mxu0 0
    %446 = vmatpush2.bf16.xpose.msra.mxu0 0
    %447 = vmatprep.subr.bf16.mxu0 0
    %448 = vmatpush2.bf16.xpose.msra.mxu0 0
    %449 = vmatprep.subr.bf16.mxu0 0
    %450 = vmatpush2.bf16.xpose.msra.mxu0 0
    %451 = vmatprep.subr.bf16.mxu0 0
    %452 = vmatpush2.bf16.xpose.msra.mxu0 0
    %453 = vmatprep.subr.bf16.mxu0 0
    %454 = vmatpush2.bf16.xpose.msra.mxu0 0
    %455 = vmatprep.subr.bf16.mxu0 0
    %456 = vmatpush2.bf16.xpose.msra.mxu0 0
    %457 = vmatprep.mubr.bf16.mxu0 0
    %458 = vmatmul.mubr.bf16.gmra.mxu0 %v420
    %v459 = vpop.f32.mrf.mxu0
    %v460 = vadd.f32 %v414, %v459
    %v461 = vpop.f32.mrf.mxu0
    %v462 = vpop.f32.mrf.mxu0
    %v463 = vpop.f32.mrf.mxu0
    %464 = vdwg.mxu0
    %v465 = vld [vmem:[#allocation2] sm:$0x1]
    %467 = vset.pattern.permute.xlu0 0
    %468 = vperm.xlu0 %467, %v465
    %v469 = vpop.permute.xlu0 %468
    %v471 = vlaneseq
    %v472 = vshrl.u32 %v471, 7
    %v473 = vsub.s32 0, %v472
    %v474 = vrot.slane %v469, %v473
    %v475 = vadd.f32 %v460, %v474
    %vm476 = vcmask 57344
    %477 = vst.msk [vmem:[#allocation3] sm:$0x1] %vm476, %v475
    // Predicated region
    $region58: #{ncf_forward.1} parent=1 // pred_check
      _
    $region59: #{ncf_forward.1} parent=1 // pred_check_branch
      %479 = sbr.rel (0) target = $region61
    $region60: #{ncf_forward.1} parent=1 // pred_region
      %s481 = ssub.s32 16, 16
      %482 = vsyncadd [#allocation4], %s481
      %s484 = sshll.u32 [#allocation3], 4
      %s485 = int_to_ptr.vmem [resolvable:$true] %s484
      %487 = dma.vmem_to_hbm [thread:$0]  %s485, 16, %s14, [#allocation4]
    $region61: #{ncf_forward.1} parent=1 // pred_fallthru
      _
    // Predicated region
    $region62: #{ncf_forward.1} parent=1 // pred_check
      _
    $region63: #{ncf_forward.1} parent=1 // pred_check_branch
      %489 = sbr.rel (0) target = $region65
    $region64: #{ncf_forward.1} parent=1 // pred_region
      %490 = dma.done [#allocation4], 16
    $region65: #{ncf_forward.1} parent=1 // pred_fallthru
      _
    %491 = vsyncpa [#allocation4], 1

</llo_original>
